<compile_context>
chip_gen: v5e
topology: v5e:2x2
jax: 0.10.0
libtpu: 0.0.40
codegen_flags: <defaults>
</compile_context>

<pallas_src>
import functools

import jax
import jax.numpy as jnp
from jax import lax
from jax.experimental import pallas as pl
from jax.experimental.pallas import tpu as pltpu


# --------------------------------------------------------------------------
# Sizing helpers
# --------------------------------------------------------------------------
def _round_up(x, m):
    return ((x + m - 1) // m) * m


def _sublane_multiple(dtype):
    # Min sublane tile: 8 for 4-byte, 16 for 2-byte, 32 for 1-byte dtypes.
    return {4: 8, 2: 16, 1: 32}.get(jnp.dtype(dtype).itemsize, 8)


@functools.lru_cache(maxsize=None)
def _vmem_budget():
    """Returns (pipeline-buffer byte budget, vmem_limit_bytes), generation-aware."""
    cap = None
    try:
        cap = pltpu.get_tpu_info().vmem_capacity_bytes
    except Exception:
        cap = None
    if cap is None:                          # unknown backend: conservative
        return 16 * 1024 * 1024, 32 * 1024 * 1024
    if cap >= 100 * 1024 * 1024:             # v5e / v6e: 128 MiB physical VMEM
        return 40 * 1024 * 1024, 64 * 1024 * 1024
    return 22 * 1024 * 1024, 48 * 1024 * 1024  # v7x: 64 MiB per TensorCore


def _compiler_params():
    _, limit = _vmem_budget()
    return pltpu.CompilerParams(
        dimension_semantics=("parallel",),
        vmem_limit_bytes=limit,
    )


def _maybe_f32(*xs):
    return tuple(x if x.dtype == jnp.float32 else x.astype(jnp.float32) for x in xs)


# --------------------------------------------------------------------------
# ncc=False path:  mean_b( max(0, margin + ||a-p||^2 - ||a-n||^2) )
# (MarginRankingLoss(x1=d_neg, x2=d_pos, y=1) == max(0, -(d_neg-d_pos)+margin))
# Each grid step writes its partial hinge sum to one SMEM scalar.
# --------------------------------------------------------------------------
def _triplet_l2_kernel(a_ref, p_ref, n_ref, o_ref, *, margin, block_rows,
                       total_rows, mask_last):
    a, p, n = _maybe_f32(a_ref[...], p_ref[...], n_ref[...])
    dp = jnp.sum((a - p) ** 2, axis=1, keepdims=True)          # (TB, 1)
    dn = jnp.sum((a - n) ** 2, axis=1, keepdims=True)          # (TB, 1)
    hinge = jnp.maximum(margin + dp - dn, 0.0)                 # (TB, 1)
    if mask_last:
        # Only emitted when rows % tile != 0 (last partial tile reads padding).
        row = pl.program_id(0) * block_rows + lax.broadcasted_iota(
            jnp.int32, hinge.shape, 0)
        hinge = jnp.where(row < total_rows, hinge, 0.0)
    o_ref[0, 0] = jnp.sum(hinge)                               # SMEM scalar


def triplet_loss_l2(anchor, positive, negative, margin, *, block_rows=None):
    B, D = anchor.shape
    itemsize = jnp.dtype(anchor.dtype).itemsize
    sub_mult = _sublane_multiple(anchor.dtype)
    d_pad = _round_up(D, 128)
    # 3 inputs x 2 pipeline buffers (+ 3 f32 cast copies for sub-32-bit inputs).
    bytes_per_row = 3 * 2 * d_pad * itemsize
    if itemsize != 4:
        bytes_per_row += 3 * d_pad * 4
    budget, _ = _vmem_budget()

    if block_rows is None:
        tb = max(sub_mult, (budget // bytes_per_row // sub_mult) * sub_mult)
    else:
        tb = max(sub_mult, (block_rows // sub_mult) * sub_mult)
    if tb >= B:
        tb = B                     # single full block (block dim == array dim is legal)
    num_tiles = pl.cdiv(B, tb)
    mask_last = (B % tb) != 0

    kernel = functools.partial(
        _triplet_l2_kernel, margin=float(margin), block_rows=tb,
        total_rows=B, mask_last=mask_last)
    cost = pl.CostEstimate(
        flops=6 * B * D,
        transcendentals=0,
        bytes_accessed=3 * B * D * itemsize + num_tiles * 4,
    )
    partials = pl.pallas_call(
        kernel,
        out_shape=jax.ShapeDtypeStruct((num_tiles, 1), jnp.float32),
        grid=(num_tiles,),
        in_specs=[pl.BlockSpec((tb, D), lambda i: (i, 0))] * 3,
        out_specs=pl.BlockSpec((1, 1), lambda i: (i, 0),
                               memory_space=pltpu.SMEM),
        compiler_params=_compiler_params(),
        cost_estimate=cost,
    )(anchor, positive, negative)
    # Finalize the mean in the wrapper (tiny; keeps the grid axis parallel).
    return jnp.sum(partials) / B


# --------------------------------------------------------------------------
# ncc=True path:
#   mcncc(v1, v2) = mean_c( sum_l(v1*v2) / (||v1||_l * ||v2||_l + 1e-12) )
#   loss = mean_b( relu( mcncc(a, n) - mcncc(a, p) + margin ) )
# Tiles span whole batch elements ((tb, C, L) blocks), so the channel mean,
# +margin, relu and per-tile batch sum all finish in-kernel; each grid step
# writes a single SMEM scalar partial.  sum(a*a) is hoisted and reused.
# --------------------------------------------------------------------------
def _triplet_ncc_kernel(a_ref, p_ref, n_ref, o_ref, *, margin, inv_c,
                        block_rows, total_rows, mask_last):
    a, p, n = _maybe_f32(a_ref[...], p_ref[...], n_ref[...])

    aa = jnp.sum(a * a, axis=2, keepdims=True)                 # (TB, C, 1)
    pp = jnp.sum(p * p, axis=2, keepdims=True)
    nn = jnp.sum(n * n, axis=2, keepdims=True)
    num_p = jnp.sum(a * p, axis=2, keepdims=True)
    num_n = jnp.sum(a * n, axis=2, keepdims=True)

    norm_a = jnp.sqrt(aa)
    ncc_p = num_p / (norm_a * jnp.sqrt(pp) + 1e-12)
    ncc_n = num_n / (norm_a * jnp.sqrt(nn) + 1e-12)
    diff = ncc_n - ncc_p                                        # (TB, C, 1)

    per_batch = jnp.sum(diff, axis=1, keepdims=True) * inv_c + margin  # (TB,1,1)
    hinge = jnp.maximum(per_batch, 0.0)
    if mask_last:
        row = pl.program_id(0) * block_rows + lax.broadcasted_iota(
            jnp.int32, hinge.shape, 0)
        hinge = jnp.where(row < total_rows, hinge, 0.0)
    o_ref[0, 0] = jnp.sum(hinge)                                # SMEM scalar


def triplet_loss_ncc(anchor, positive, negative, margin, *, block_rows=None):
    B, C, H, W = anchor.shape
    L = H * W
    a = anchor.reshape(B, C, L)
    p = positive.reshape(B, C, L)
    n = negative.reshape(B, C, L)

    itemsize = jnp.dtype(anchor.dtype).itemsize
    sub_mult = _sublane_multiple(anchor.dtype)
    c_pad = _round_up(C, sub_mult)          # sublane padding of the channel dim
    l_pad = _round_up(L, 128)               # lane padding
    bytes_per_row = 3 * 2 * c_pad * l_pad * itemsize
    if itemsize != 4:
        bytes_per_row += 3 * _round_up(C, 8) * l_pad * 4       # f32 cast copies
    budget, _ = _vmem_budget()

    if block_rows is None:
        tb = max(1, budget // bytes_per_row)   # leading dim: no sublane rounding
    else:
        tb = max(1, int(block_rows))
    tb = min(tb, B)
    num_tiles = pl.cdiv(B, tb)
    mask_last = (B % tb) != 0

    kernel = functools.partial(
        _triplet_ncc_kernel, margin=float(margin), inv_c=1.0 / C,
        block_rows=tb, total_rows=B, mask_last=mask_last)
    cost = pl.CostEstimate(
        flops=10 * B * C * L,
        transcendentals=3 * B * C,
        bytes_accessed=3 * B * C * L * itemsize + num_tiles * 4,
    )
    partials = pl.pallas_call(
        kernel,
        out_shape=jax.ShapeDtypeStruct((num_tiles, 1), jnp.float32),
        grid=(num_tiles,),
        in_specs=[pl.BlockSpec((tb, C, L), lambda i: (i, 0, 0))] * 3,
        out_specs=pl.BlockSpec((1, 1), lambda i: (i, 0),
                               memory_space=pltpu.SMEM),
        compiler_params=_compiler_params(),
        cost_estimate=cost,
    )(a, p, n)
    return jnp.sum(partials) / B


# --------------------------------------------------------------------------
# Thin module-style wrapper mirroring the PyTorch class (no learnable params).
# --------------------------------------------------------------------------
class TripletLoss:
    def __init__(self, margin, ncc=False):
        self.margin = margin
        self.ncc = ncc

    def __call__(self, anchor, positive, negative, size_average=True):
        if not self.ncc:
            # PyTorch MarginRankingLoss already mean-reduces, so the trailing
            # .mean()/.sum() acts on a scalar and size_average is a no-op.
            return triplet_loss_l2(anchor, positive, negative, self.margin)
        return triplet_loss_ncc(anchor, positive, negative, self.margin)


# --------------------------------------------------------------------------
# Pure-JAX references for validation.
# --------------------------------------------------------------------------
def _ref_l2(a, p, n, margin):
    dp = jnp.sum((a - p) ** 2, axis=1)
    dn = jnp.sum((a - n) ** 2, axis=1)
    return jnp.mean(jnp.maximum(0.0, margin + dp - dn))


def _ref_ncc(a, p, n, margin):
    B, C, H, W = a.shape
    a, p, n = (x.reshape(B, C, H * W) for x in (a, p, n))

    def mcncc(v1, v2):
        den = (jnp.linalg.norm(v1, axis=2) * jnp.linalg.norm(v2, axis=2) + 1e-12)
        return jnp.mean(jnp.sum(v1 * v2, axis=2) / den, axis=1)

    losses = jax.nn.relu(mcncc(a, n) - mcncc(a, p) + margin)
    return jnp.mean(losses)


if __name__ == "__main__":
    key = jax.random.PRNGKey(0)
    margin = 0.3

    # --- ncc=False, small: flat embeddings (B, D), single-tile fast path ---
    B, D = 8, 32
    k1, k2, k3, k4, k5, k6, k7, k8, k9 = jax.random.split(key, 9)
    a2 = jax.random.normal(k1, (B, D), jnp.float32)
    p2 = jax.random.normal(k2, (B, D), jnp.float32)
    n2 = jax.random.normal(k3, (B, D), jnp.float32)
    loss_l2 = jax.block_until_ready(TripletLoss(margin, ncc=False)(a2, p2, n2))
    ref_l2 = _ref_l2(a2, p2, n2, margin)
    assert jnp.allclose(loss_l2, ref_l2, rtol=1e-5, atol=1e-5), (loss_l2, ref_l2)

    # --- ncc=False, gridded: non-divisible B exercises masking + partials ---
    Bg, Dg = 20, 64
    a2g = jax.random.normal(k4, (Bg, Dg), jnp.float32)
    p2g = jax.random.normal(k5, (Bg, Dg), jnp.float32)
    n2g = jax.random.normal(k6, (Bg, Dg), jnp.float32)
    loss_l2g = jax.block_until_ready(
        triplet_loss_l2(a2g, p2g, n2g, margin, block_rows=8))
    ref_l2g = _ref_l2(a2g, p2g, n2g, margin)
    assert jnp.allclose(loss_l2g, ref_l2g, rtol=1e-5, atol=1e-5), (loss_l2g, ref_l2g)

    # --- ncc=True, small: NCHW feature maps (B, C, H, W) ---
    Bc, C, H, W = 2, 4, 16, 16
    a4 = jax.random.normal(k7, (Bc, C, H, W), jnp.float32)
    p4 = a4 + 0.1 * jax.random.normal(k8, (Bc, C, H, W), jnp.float32)
    n4 = jax.random.normal(k9, (Bc, C, H, W), jnp.float32)
    loss_ncc = jax.block_until_ready(TripletLoss(margin, ncc=True)(a4, p4, n4))
    ref_ncc = _ref_ncc(a4, p4, n4, margin)
    assert jnp.allclose(loss_ncc, ref_ncc, rtol=1e-5, atol=1e-5), (loss_ncc, ref_ncc)

    # --- ncc=True, gridded: B not divisible by the batch-row tile ---
    a4g = jax.random.normal(k1, (3, 4, 8, 8), jnp.float32)
    p4g = a4g + 0.1 * jax.random.normal(k2, (3, 4, 8, 8), jnp.float32)
    n4g = jax.random.normal(k3, (3, 4, 8, 8), jnp.float32)
    loss_nccg = jax.block_until_ready(
        triplet_loss_ncc(a4g, p4g, n4g, margin, block_rows=2))
    ref_nccg = _ref_ncc(a4g, p4g, n4g, margin)
    assert jnp.allclose(loss_nccg, ref_nccg, rtol=1e-5, atol=1e-5), (loss_nccg, ref_nccg)

    print("KERNEL_OK")
</pallas_src>

<mosaic_0001>
module attributes {stable_mosaic.version = 11 : i64} {
  func.func @_triplet_l2_kernel(%arg0: i32, %arg1: memref<8x32xf32, #tpu.memory_space<vmem>>, %arg2: memref<8x32xf32, #tpu.memory_space<vmem>>, %arg3: memref<8x32xf32, #tpu.memory_space<vmem>>, %arg4: memref<1x1xf32, #tpu.memory_space<smem>>) attributes {dimension_semantics = [#tpu.dimension_semantics<parallel>], iteration_bounds = array<i64: 1>, scalar_prefetch = 0 : i64, scratch_operands = 0 : i64, tpu.core_type = #tpu.core_type<tc>, window_params = [{transform_indices = @transform_0, window_bounds = array<i64: 8, 32>}, {transform_indices = @transform_1, window_bounds = array<i64: 8, 32>}, {transform_indices = @transform_2, window_bounds = array<i64: 8, 32>}, {transform_indices = @transform_3, window_bounds = array<i64: 1, 1>}]} {
    %c0 = arith.constant 0 : index
    %c0_0 = arith.constant 0 : index
    %0 = vector.load %arg1[%c0, %c0_0] : memref<8x32xf32, #tpu.memory_space<vmem>>, vector<8x32xf32>
    %c0_1 = arith.constant 0 : index
    %c0_2 = arith.constant 0 : index
    %1 = vector.load %arg2[%c0_1, %c0_2] : memref<8x32xf32, #tpu.memory_space<vmem>>, vector<8x32xf32>
    %c0_3 = arith.constant 0 : index
    %c0_4 = arith.constant 0 : index
    %2 = vector.load %arg3[%c0_3, %c0_4] : memref<8x32xf32, #tpu.memory_space<vmem>>, vector<8x32xf32>
    %3 = arith.subf %0, %1 : vector<8x32xf32>
    %4 = arith.mulf %3, %3 : vector<8x32xf32>
    %cst = arith.constant dense<0.000000e+00> : vector<8xf32>
    %5 = vector.multi_reduction <add>, %4, %cst [1] : vector<8x32xf32> to vector<8xf32>
    %6 = vector.shape_cast %5 : vector<8xf32> to vector<8x1xf32>
    %7 = arith.subf %0, %2 : vector<8x32xf32>
    %8 = arith.mulf %7, %7 : vector<8x32xf32>
    %cst_5 = arith.constant dense<0.000000e+00> : vector<8xf32>
    %9 = vector.multi_reduction <add>, %8, %cst_5 [1] : vector<8x32xf32> to vector<8xf32>
    %10 = vector.shape_cast %9 : vector<8xf32> to vector<8x1xf32>
    %cst_6 = arith.constant 3.000000e-01 : f32
    %11 = vector.broadcast %cst_6 : f32 to vector<8x1xf32>
    %12 = arith.addf %11, %6 : vector<8x1xf32>
    %13 = arith.subf %12, %10 : vector<8x1xf32>
    %cst_7 = arith.constant 0.000000e+00 : f32
    %14 = vector.broadcast %cst_7 : f32 to vector<8x1xf32>
    %15 = arith.maximumf %13, %14 : vector<8x1xf32>
    %16 = vector.shape_cast %15 : vector<8x1xf32> to vector<1x8x1xf32>
    %cst_8 = arith.constant dense<0.000000e+00> : vector<1xf32>
    %17 = vector.multi_reduction <add>, %16, %cst_8 [1, 2] : vector<1x8x1xf32> to vector<1xf32>
    %18 = vector.shape_cast %17 : vector<1xf32> to vector<1x1x1xf32>
    %19 = vector.extract %18[0, 0, 0] : f32 from vector<1x1x1xf32>
    %c0_9 = arith.constant 0 : index
    %c0_10 = arith.constant 0 : index
    %20 = memref.load %arg4[%c0_9, %c0_10] : memref<1x1xf32, #tpu.memory_space<smem>>
    memref.store %19, %arg4[%c0_9, %c0_10] : memref<1x1xf32, #tpu.memory_space<smem>>
    return
  }
  func.func @transform_0(%arg0: i32) -> (i32, i32) {
    %c0_i32 = arith.constant 0 : i32
    %c0_i32_0 = arith.constant 0 : i32
    return %arg0, %c0_i32 : i32, i32
  }
  func.func @transform_1(%arg0: i32) -> (i32, i32) {
    %c0_i32 = arith.constant 0 : i32
    %c0_i32_0 = arith.constant 0 : i32
    return %arg0, %c0_i32 : i32, i32
  }
  func.func @transform_2(%arg0: i32) -> (i32, i32) {
    %c0_i32 = arith.constant 0 : i32
    %c0_i32_0 = arith.constant 0 : i32
    return %arg0, %c0_i32 : i32, i32
  }
  func.func @transform_3(%arg0: i32) -> (i32, i32) {
    %c0_i32 = arith.constant 0 : i32
    %c0_i32_0 = arith.constant 0 : i32
    return %arg0, %c0_i32 : i32, i32
  }
}

</mosaic_0001>

<llo_original>
// kernel: tpu_custom_call.1
$region0: #{tpu_custom_call.1}
  #allocation0 [shape = 'u32[]', space=smem, size = 0x4, offset = 0x4, fixed_abs, tag = 'smem constant byte address 0x4 - core index']
  #allocation1 [shape = 'u32[72,128]{1,0:T(1,128)}', space=vmem, size = 0x9000, scoped, tag = 'internal scratch']
  %s0 = inlined_call_operand.hbm [shape: f32[8,32], index: 0, kind: input, shape index: {}]
  %s1 = inlined_call_operand.hbm [shape: f32[8,32], index: 1, kind: input, shape index: {}]
  %s2 = inlined_call_operand.hbm [shape: f32[8,32], index: 2, kind: input, shape index: {}]
  %s3 = inlined_call_operand.hbm [shape: f32[1,1], index: 3, kind: output, shape index: {}]
  %s4 = sld [smem:[#allocation0]]
  $region34: #{tpu_custom_call.1} parent=0
    _
  %s6 = ssub.s32 1, %s4
  %s7 = scalar_select 0, %s6, %s4
  $region1: #{tpu_custom_call.1} parent=0
    #allocation2 [shape = 'u8[4096]{0}', space=vmem, size = 0x1000, scoped, tag = 'input window, operand 0, single buffered']
    #allocation3 [shape = 's32[1]{0}', space=sflag, size = 0x4, scoped, tag = 'scoped memory for tpu_custom_call.1']
    #allocation4 [shape = 's32[1]{0}', space=sflag, size = 0x4, scoped, tag = 'scoped memory for tpu_custom_call.1']
    #allocation5 [shape = 'u8[4096]{0}', space=vmem, size = 0x1000, scoped, tag = 'input window, operand 1, single buffered']
    #allocation6 [shape = 's32[1]{0}', space=sflag, size = 0x4, scoped, tag = 'scoped memory for tpu_custom_call.1']
    #allocation7 [shape = 'u8[4096]{0}', space=vmem, size = 0x1000, scoped, tag = 'input window, operand 2, single buffered']
    #allocation8 [shape = 'u8[512]{0}', space=smem, size = 0x200, scoped, tag = 'output window, operand 0, single buffered']
    %8 = vsyncpa [#allocation3], 0
    %9 = vsyncpa [#allocation6], 0
    %10 = vsyncpa [#allocation4], 0
    // Predicated region
    $region2: #{tpu_custom_call.1} parent=1 // pred_check
      _
    $region3: #{tpu_custom_call.1} parent=1 // pred_check_branch
      %12 = sbr.rel (0) target = $region5
    $region4: #{tpu_custom_call.1} parent=1 // pred_region
      %14 = vsyncadd [#allocation3], 0
      %s16 = sshll.u32 %s0, 4
      %s17 = int_to_ptr.hbm [resolvable:$true] %s16
      %s18 = sshll.u32 [#allocation2], 4
      %s19 = int_to_ptr.vmem [resolvable:$true] %s18
      %21 = dma.hbm_to_vmem [thread:$0]  %s17, 128, %s19, [#allocation3]
    $region5: #{tpu_custom_call.1} parent=1 // pred_fallthru
      _
    // Predicated region
    $region6: #{tpu_custom_call.1} parent=1 // pred_check
      _
    $region7: #{tpu_custom_call.1} parent=1 // pred_check_branch
      %23 = sbr.rel (0) target = $region9
    $region8: #{tpu_custom_call.1} parent=1 // pred_region
      %25 = vsyncadd [#allocation6], 0
      %s27 = sshll.u32 %s1, 4
      %s28 = int_to_ptr.hbm [resolvable:$true] %s27
      %s29 = sshll.u32 [#allocation5], 4
      %s30 = int_to_ptr.vmem [resolvable:$true] %s29
      %32 = dma.hbm_to_vmem [thread:$0]  %s28, 128, %s30, [#allocation6]
    $region9: #{tpu_custom_call.1} parent=1 // pred_fallthru
      _
    // Predicated region
    $region10: #{tpu_custom_call.1} parent=1 // pred_check
      _
    $region11: #{tpu_custom_call.1} parent=1 // pred_check_branch
      %34 = sbr.rel (0) target = $region13
    $region12: #{tpu_custom_call.1} parent=1 // pred_region
      %36 = vsyncadd [#allocation6], 0
      %s38 = sshll.u32 %s2, 4
      %s39 = int_to_ptr.hbm [resolvable:$true] %s38
      %s40 = sshll.u32 [#allocation7], 4
      %s41 = int_to_ptr.vmem [resolvable:$true] %s40
      %43 = dma.hbm_to_vmem [thread:$0]  %s39, 128, %s41, [#allocation6]
    $region13: #{tpu_custom_call.1} parent=1 // pred_fallthru
      _
    // Predicated region
    $region14: #{tpu_custom_call.1} parent=1 // pred_check
      _
    $region15: #{tpu_custom_call.1} parent=1 // pred_check_branch
      %45 = sbr.rel (0) target = $region17
    $region16: #{tpu_custom_call.1} parent=1 // pred_region
      %47 = dma.done [#allocation3], 128
    $region17: #{tpu_custom_call.1} parent=1 // pred_fallthru
      _
    // Predicated region
    $region18: #{tpu_custom_call.1} parent=1 // pred_check
      _
    $region19: #{tpu_custom_call.1} parent=1 // pred_check_branch
      %49 = sbr.rel (0) target = $region21
    $region20: #{tpu_custom_call.1} parent=1 // pred_region
      %51 = dma.done [#allocation6], 128
    $region21: #{tpu_custom_call.1} parent=1 // pred_fallthru
      _
    // Predicated region
    $region22: #{tpu_custom_call.1} parent=1 // pred_check
      _
    $region23: #{tpu_custom_call.1} parent=1 // pred_check_branch
      %53 = sbr.rel (0) target = $region25
    $region24: #{tpu_custom_call.1} parent=1 // pred_region
      %55 = dma.done [#allocation6], 128
    $region25: #{tpu_custom_call.1} parent=1 // pred_fallthru
      _
    %v56 = vld [vmem:[#allocation2] sm:$0xff]
    %v57 = vld [vmem:[#allocation5] sm:$0xff]
    %v58 = vld [vmem:[#allocation7] sm:$0xff]
    %v59 = vsub.f32 %v56, %v57
    %v60 = vmul.f32 %v59, %v59
    %vm61 = vcmask 261120
    %v62 = vsel %vm61, %v60, 0.0
    %63 = vadd.xlane.f32.xlu0 %v62
    %v64 = vpop.xlane.xlu0 %63
    %v65 = vsub.f32 %v56, %v58
    %v66 = vmul.f32 %v65, %v65
    %v67 = vsel %vm61, %v66, 0.0
    %68 = vadd.xlane.f32.xlu0 %v67
    %v69 = vpop.xlane.xlu0 %68
    %v70 = vadd.f32 %v64, 0.3
    %v71 = vsub.f32 %v70, %v69
    %v72 = vmax.f32 %v71, 0.0
    %vm73 = vcmask 7168
    %v74 = vsel %vm73, %v72, 0.0
    %75 = vadd.xlane.f32.xlu0 %v74
    %v76 = vpop.xlane.xlu0 %75
    %v77 = vrot.slane %v76, 4
    %v78 = vadd.f32 %v76, %v77
    %v79 = vrot.slane %v78, 2
    %v80 = vadd.f32 %v78, %v79
    %v81 = vrot.slane %v80, 1
    %v82 = vadd.f32 %v80, %v81
    %s83 = vtos %v82
    %s84 = scalar_lea.smem [#allocation8], 0
    %85 = sst [smem:[%s84]] %s83
    // Predicated region
    $region26: #{tpu_custom_call.1} parent=1 // pred_check
      _
    $region27: #{tpu_custom_call.1} parent=1 // pred_check_branch
      %87 = sbr.rel (0) target = $region29
    $region28: #{tpu_custom_call.1} parent=1 // pred_region
      %89 = vsyncadd [#allocation4], 0
      %s91 = sshll.u32 %s3, 4
      %s92 = int_to_ptr.hbm [resolvable:$true] %s91
      %94 = dma.smem_to_hbm [#allocation8], 16, %s92, [#allocation4]
    $region29: #{tpu_custom_call.1} parent=1 // pred_fallthru
      _
    // Predicated region
    $region30: #{tpu_custom_call.1} parent=1 // pred_check
      _
    $region31: #{tpu_custom_call.1} parent=1 // pred_check_branch
      %96 = sbr.rel (0) target = $region33
    $region32: #{tpu_custom_call.1} parent=1 // pred_region
      %98 = dma.done [#allocation4], 16
    $region33: #{tpu_custom_call.1} parent=1 // pred_fallthru
      _
    %99 = sfence
    %100 = vsyncpa [#allocation3], 1
    %101 = vsyncpa [#allocation6], 1
    %102 = vsyncpa [#allocation4], 1

</llo_original>
